<compile_context>
chip_gen: v6e
topology: v6e:2x2x1
jax: 0.10.0
libtpu: 0.0.40
codegen_flags: <defaults>
</compile_context>

<pallas_src>
import functools

import jax
import jax.numpy as jnp
import numpy as np
from jax.experimental import pallas as pl
from jax.experimental.pallas import tpu as pltpu


def _leaky_relu(x, slope=0.1):
    # max(x, slope*x) == LeakyReLU_slope(x) exactly for 0 < slope < 1.
    return jnp.maximum(x, slope * x)


def _pad8(n):
    return int(-(-int(n) // 8) * 8)


def _gso_powers(S, k_max):
    """S^1 .. S^{max(k_max-1, 1)} in float32 (shared by kernel wrapper and reference)."""
    S32 = S.astype(jnp.float32)
    pows, Sk = [], S32
    for _ in range(max(k_max - 1, 1)):
        pows.append(Sk)
        Sk = jnp.dot(Sk, S32, preferred_element_type=jnp.float32)
    return pows


def make_convgnn_kernel(K_list, n_mlp_layers, mxu_dtype):
    """Build the fused kernel. K_list = static filter-tap counts per GF layer."""
    n_gf = len(K_list)

    def kernel(*refs):
        x_ref, spow_ref = refs[0], refs[1]
        param_refs = refs[2:2 + 2 * (n_gf + n_mlp_layers)]
        o_ref, z_ref = refs[-2], refs[-1]          # output, VMEM scratch for Z

        y = x_ref[...].astype(jnp.float32)          # (P0, L), L = lanes = TB*N

        # ---- Graph filter layers: one (F_out, K*P_in) x (K*P_in, L) matmul each.
        for l, K in enumerate(K_list):
            w_ref, b_ref = param_refs[2 * l], param_refs[2 * l + 1]
            P_in = w_ref.shape[1] // K              # padded F_in, multiple of 8
            kf = K * P_in
            if K == 1:
                zcat = y
            else:
                y_mx = y.astype(mxu_dtype)
                # Assemble tap-major Z = [y; y@S; y@S^2; ...] in VMEM scratch.
                # All row offsets are multiples of 8 (padded feature dims) ->
                # aligned, unmasked sublane stores.
                z_ref[0:P_in, :] = y                # tap k = 0
                for k in range(1, K):
                    # Independent diffusions z_k = y @ S^k (S^k precomputed,
                    # block-diagonal over the batch folded into the lane axis).
                    z_ref[k * P_in:(k + 1) * P_in, :] = jnp.dot(
                        y_mx, spow_ref[k - 1],
                        preferred_element_type=jnp.float32)
                zcat = z_ref[0:kf, :]
            acc = jnp.dot(w_ref[...], zcat.astype(mxu_dtype),
                          preferred_element_type=jnp.float32)
            y = _leaky_relu(acc + b_ref[...])       # bias/activation in f32

        # ---- Per-node readout MLP (Linear -> LeakyReLU per layer, as in the module).
        for m in range(n_mlp_layers):
            w_ref = param_refs[2 * (n_gf + m)]
            b_ref = param_refs[2 * (n_gf + m) + 1]
            y = jnp.dot(w_ref[...], y.astype(mxu_dtype),
                        preferred_element_type=jnp.float32) + b_ref[...]
            y = _leaky_relu(y)

        o_ref[...] = y.astype(o_ref.dtype)          # (1, L) lane-dense store

    return kernel


def _full_spec(arr):
    zeros = (0,) * arr.ndim
    return pl.BlockSpec(arr.shape, lambda i, _z=zeros: _z)


def _pad_params(params, K_list):
    """Zero-pad feature dims to multiples of 8 (sublane tile). Exact semantics:
    padded weight rows/cols and bias rows are zero, so padded channels stay 0."""
    n_gf = len(K_list)
    n_layers = len(params)
    dims = [params[0][0].shape[1] // K_list[0]]
    for l in range(n_layers):
        dims.append(params[l][0].shape[0])
    # Pad every dim except the final output dim (it is stored as-is).
    P = [_pad8(d) for d in dims[:-1]] + [int(dims[-1])]

    padded = []
    for l in range(n_layers):
        w, b = params[l]
        p_in, p_out = P[l], P[l + 1]
        f_out = w.shape[0]
        if l < n_gf:
            K = K_list[l]
            f_in = w.shape[1] // K
            w_pad = jnp.zeros((p_out, K * p_in), dtype=w.dtype)
            for k in range(K):
                w_pad = w_pad.at[:f_out, k * p_in:k * p_in + f_in].set(
                    w[:, k * f_in:(k + 1) * f_in])
        else:
            f_in = w.shape[1]
            w_pad = jnp.zeros((p_out, p_in), dtype=w.dtype)
            w_pad = w_pad.at[:f_out, :f_in].set(w)
        b_pad = jnp.zeros((p_out, 1), dtype=b.dtype).at[:f_out, :].set(b)
        padded.append((w_pad, b_pad))
    return padded, P


def convgnn_forward(x, S, params, K_list, *, mxu_dtype=jnp.bfloat16,
                    batch_tile=None):
    """x: (B, F0, N) node signals, S: (N, N) GSO. Returns (B, N)."""
    B, F0, N = x.shape
    K_list = tuple(int(k) for k in K_list)
    n_gf = len(K_list)
    n_mlp = len(params) - n_gf
    assert params[-1][0].shape[0] == 1, \
        "final layer must have 1 output feature (the module's reshape requires it)"

    # Batch elements per grid step (lane-axis tile). Demo batch is tiny, so the
    # default is the whole batch -> a single grid step.
    tb = B if batch_tile is None else int(batch_tile)
    assert B % tb == 0
    if tb != B:
        # Partial tiles of the lane-folded axis must be 128-lane aligned.
        assert (tb * N) % 128 == 0
    L = tb * N
    n_tiles = B // tb

    # Pad feature dims to the sublane tile (exact, zero-filled).
    padded_params, P = _pad_params(params, K_list)
    P0 = P[0]

    # Lane-dense layout: fold batch into the node (lane) axis -> (P0, B*N).
    x2d = jnp.transpose(x, (1, 0, 2)).reshape(F0, B * N).astype(jnp.float32)
    if P0 != F0:
        x2d = jnp.concatenate(
            [x2d, jnp.zeros((P0 - F0, B * N), jnp.float32)], axis=0)

    # Precompute S^1..S^{Kmax-1} (f32) and make them block-diagonal over the `tb`
    # batch elements sharing a lane tile: every tap becomes one independent matmul.
    pows = _gso_powers(S, max(K_list))
    eye_tb = jnp.eye(tb, dtype=jnp.float32)
    spow_bd = jnp.stack([jnp.kron(eye_tb, Pw) for Pw in pows], 0).astype(mxu_dtype)

    # Weights in MXU dtype; biases pre-broadcast to lane width (kept in f32).
    flat_params = []
    for w, b in padded_params:
        flat_params.append(w.astype(mxu_dtype))
        flat_params.append(jnp.broadcast_to(b.astype(jnp.float32),
                                            (b.shape[0], L)))

    # VMEM scratch rows for the tap-concatenated Z (= max K*P_in over GF layers).
    z_rows = max(K_list[l] * P[l] for l in range(n_gf))

    kernel = make_convgnn_kernel(K_list, n_mlp, mxu_dtype)

    # NOTE (v7x, 64 MiB VMEM): spow_bd / weights are grid-invariant; if N grows
    # large, single-buffer them (pipeline_mode=pl.Buffered(1)) and/or set
    # pltpu.CompilerParams(vmem_limit_bytes=...) to avoid needless double buffers.
    out = pl.pallas_call(
        kernel,
        out_shape=jax.ShapeDtypeStruct((1, B * N), jnp.float32),
        grid=(n_tiles,),
        in_specs=[pl.BlockSpec((P0, L), lambda i: (0, i)),   # lane-folded signals
                  _full_spec(spow_bd)] + [_full_spec(a) for a in flat_params],
        out_specs=pl.BlockSpec((1, L), lambda i: (0, i)),    # lane-dense output
        scratch_shapes=[pltpu.VMEM((z_rows, L), jnp.float32)],
        compiler_params=pltpu.CompilerParams(
            # Per-step work is tiny; don't shard a step across TensorCores.
            dimension_semantics=("arbitrary",)),
    )(x2d, spow_bd, *flat_params)
    return out.reshape(B, N)


def convgnn_reference(x, S, params, K_list, mxu_dtype=jnp.float32):
    """Pure-JAX reference of the module's forward pass (on UNPADDED params).

    Mathematically identical to the PyTorch serial diffusion (z_k = z_{k-1} @ S
    == y @ S^k); mirrors the kernel's dtype handling (mxu_dtype matmul operands,
    f32 accumulation / bias / LeakyReLU) so the kernel can be checked tightly
    even when mxu_dtype == bfloat16. With mxu_dtype == float32 it is the exact
    f32 module semantics.
    """
    K_list = tuple(int(k) for k in K_list)
    n_gf = len(K_list)
    pows = [p.astype(mxu_dtype) for p in _gso_powers(S, max(K_list))]

    y = x.astype(jnp.float32)                                # (B, F_in, N)
    for l, K in enumerate(K_list):
        w, b = params[l]
        y_mx = y.astype(mxu_dtype)
        taps = [y]                                           # tap k = 0
        for k in range(1, K):
            taps.append(jnp.einsum('bfm,mn->bfn', y_mx, pows[k - 1],
                                   preferred_element_type=jnp.float32))
        zcat = jnp.concatenate(taps, axis=1).astype(mxu_dtype)   # (B, K*F_in, N)
        acc = jnp.einsum('of,bfn->bon', w.astype(mxu_dtype), zcat,
                         preferred_element_type=jnp.float32)
        y = _leaky_relu(acc + b.astype(jnp.float32)[None, :, :])
    for m in range(n_gf, len(params)):
        w, b = params[m]
        y = jnp.einsum('of,bfn->bon', w.astype(mxu_dtype), y.astype(mxu_dtype),
                       preferred_element_type=jnp.float32) \
            + b.astype(jnp.float32)[None, :, :]
        y = _leaky_relu(y)
    return y[:, 0, :]


def init_params(key, dimNodeSignals, nFilterTaps, dimLayersMLP):
    """Deterministic parameter init matching the module's shapes (E = 1)."""
    n_keys = 2 * len(nFilterTaps) + max(len(dimLayersMLP) - 1, 1)
    keys = jax.random.split(key, n_keys)
    params, ki = [], 0
    # GraphFilter layers: weight (F_out, K*F_in) tap-major, bias (F_out, 1).
    for l in range(len(nFilterTaps)):
        F_in, F_out, K = dimNodeSignals[l], dimNodeSignals[l + 1], nFilterTaps[l]
        scale = 1.0 / np.sqrt(F_in * K)
        w = jax.random.uniform(keys[ki], (F_out, K * F_in),
                               minval=-scale, maxval=scale, dtype=jnp.float32)
        ki += 1
        b = jax.random.uniform(keys[ki], (F_out, 1),
                               minval=-scale, maxval=scale, dtype=jnp.float32)
        ki += 1
        params.append((w, b))
    # MLP layers: Linear(dimLayersMLP[l] -> dimLayersMLP[l+1]), xavier w, bias = 0.01.
    for l in range(len(dimLayersMLP) - 1):
        fan_in, fan_out = dimLayersMLP[l], dimLayersMLP[l + 1]
        bound = np.sqrt(6.0 / (fan_in + fan_out))
        w = jax.random.uniform(keys[ki], (fan_out, fan_in),
                               minval=-bound, maxval=bound, dtype=jnp.float32)
        ki += 1
        b = jnp.full((fan_out, 1), 0.01, dtype=jnp.float32)
        params.append((w, b))
    return params


if __name__ == "__main__":
    # Small config consistent with the module:
    #   dimNodeSignals = [4, 8, 8], nFilterTaps = [3, 2], bias = True,
    #   nonlinearity = LeakyReLU(0.1), dimLayersMLP = [8, 16, 1], N = 16 nodes.
    B, N = 2, 16
    dimNodeSignals = [4, 8, 8]
    nFilterTaps = [3, 2]
    dimLayersMLP = [dimNodeSignals[-1], 16, 1]

    key = jax.random.PRNGKey(0)
    kx, ks, kp = jax.random.split(key, 3)

    # Input node signals: batchSize x dimFeatures x numberNodes
    x = jax.random.normal(kx, (B, dimNodeSignals[0], N), dtype=jnp.float32)

    # Deterministic symmetric GSO, normalized to unit spectral radius.
    A = jax.random.normal(ks, (N, N), dtype=jnp.float32)
    A = 0.5 * (A + A.T)
    S = A / jnp.max(jnp.abs(jnp.linalg.eigvalsh(A)))

    params = init_params(kp, dimNodeSignals, nFilterTaps, dimLayersMLP)

    run = jax.jit(functools.partial(convgnn_forward, K_list=tuple(nFilterTaps),
                                    mxu_dtype=jnp.bfloat16))
    y = jax.block_until_ready(run(x, S, params))
    assert y.shape == (B, N)

    # Tight check against a pure-JAX reference with the same dtype handling.
    y_ref = convgnn_reference(x, S, params, tuple(nFilterTaps),
                              mxu_dtype=jnp.bfloat16)
    np.testing.assert_allclose(np.asarray(y), np.asarray(y_ref),
                               rtol=1e-2, atol=1e-2)
    # Loose check against exact f32 module semantics (bounds the bf16 MXU error).
    y_f32 = convgnn_reference(x, S, params, tuple(nFilterTaps),
                              mxu_dtype=jnp.float32)
    np.testing.assert_allclose(np.asarray(y), np.asarray(y_f32),
                               rtol=5e-2, atol=5e-2)

    print("KERNEL_OK")
</pallas_src>

<mosaic_0001>
module attributes {stable_mosaic.version = 11 : i64} {
  func.func @kernel(%arg0: i32, %arg1: memref<8x32xf32, #tpu.memory_space<vmem>>, %arg2: memref<2x32x32xbf16, #tpu.memory_space<vmem>>, %arg3: memref<8x24xbf16, #tpu.memory_space<vmem>>, %arg4: memref<8x32xf32, #tpu.memory_space<vmem>>, %arg5: memref<8x16xbf16, #tpu.memory_space<vmem>>, %arg6: memref<8x32xf32, #tpu.memory_space<vmem>>, %arg7: memref<16x8xbf16, #tpu.memory_space<vmem>>, %arg8: memref<16x32xf32, #tpu.memory_space<vmem>>, %arg9: memref<1x16xbf16, #tpu.memory_space<vmem>>, %arg10: memref<1x32xf32, #tpu.memory_space<vmem>>, %arg11: memref<1x32xf32, #tpu.memory_space<vmem>>, %arg12: memref<24x32xf32, #tpu.memory_space<vmem>>) attributes {dimension_semantics = [#tpu.dimension_semantics<arbitrary>], iteration_bounds = array<i64: 1>, scalar_prefetch = 0 : i64, scratch_operands = 1 : i64, tpu.core_type = #tpu.core_type<tc>, window_params = [{transform_indices = @transform_0, window_bounds = array<i64: 8, 32>}, {pipeline_mode = #tpu.pipeline_mode<synchronous>, transform_indices = @transform_1, window_bounds = array<i64: 2, 32, 32>}, {pipeline_mode = #tpu.pipeline_mode<synchronous>, transform_indices = @transform_2, window_bounds = array<i64: 8, 24>}, {pipeline_mode = #tpu.pipeline_mode<synchronous>, transform_indices = @transform_3, window_bounds = array<i64: 8, 32>}, {pipeline_mode = #tpu.pipeline_mode<synchronous>, transform_indices = @transform_4, window_bounds = array<i64: 8, 16>}, {pipeline_mode = #tpu.pipeline_mode<synchronous>, transform_indices = @transform_5, window_bounds = array<i64: 8, 32>}, {pipeline_mode = #tpu.pipeline_mode<synchronous>, transform_indices = @transform_6, window_bounds = array<i64: 16, 8>}, {pipeline_mode = #tpu.pipeline_mode<synchronous>, transform_indices = @transform_7, window_bounds = array<i64: 16, 32>}, {pipeline_mode = #tpu.pipeline_mode<synchronous>, transform_indices = @transform_8, window_bounds = array<i64: 1, 16>}, {pipeline_mode = #tpu.pipeline_mode<synchronous>, transform_indices = @transform_9, window_bounds = array<i64: 1, 32>}, {transform_indices = @transform_10, window_bounds = array<i64: 1, 32>}]} {
    %c0 = arith.constant 0 : index
    %c0_0 = arith.constant 0 : index
    %0 = vector.load %arg1[%c0, %c0_0] : memref<8x32xf32, #tpu.memory_space<vmem>>, vector<8x32xf32>
    %1 = arith.truncf %0 : vector<8x32xf32> to vector<8x32xbf16>
    %c0_1 = arith.constant 0 : index
    %c0_2 = arith.constant 0 : index
    %2 = vector.load %arg12[%c0_1, %c0_2] : memref<24x32xf32, #tpu.memory_space<vmem>>, vector<8x32xf32>
    tpu.vector_store %arg12[%c0_1, %c0_2], %0 {strides = array<i32>} : memref<24x32xf32, #tpu.memory_space<vmem>>, vector<8x32xf32>,
    %c0_3 = arith.constant 0 : index
    %c0_4 = arith.constant 0 : index
    %c0_5 = arith.constant 0 : index
    %3 = vector.load %arg2[%c0_3, %c0_4, %c0_5] : memref<2x32x32xbf16, #tpu.memory_space<vmem>>, vector<1x32x32xbf16>
    %4 = vector.shape_cast %3 : vector<1x32x32xbf16> to vector<32x32xbf16>
    %cst = arith.constant dense<0.000000e+00> : vector<8x32xf32>
    %5 = tpu.matmul %1, %4, %cst {dimension_numbers = #tpu.dot_dimension_numbers<[1], [0], [0], [1], [0, 0, 1, 1], [], []>} : vector<8x32xbf16>, vector<32x32xbf16>, vector<8x32xf32> -> vector<8x32xf32>
    %c8 = arith.constant 8 : index
    %c0_6 = arith.constant 0 : index
    %6 = vector.load %arg12[%c8, %c0_6] : memref<24x32xf32, #tpu.memory_space<vmem>>, vector<8x32xf32>
    tpu.vector_store %arg12[%c8, %c0_6], %5 {strides = array<i32>} : memref<24x32xf32, #tpu.memory_space<vmem>>, vector<8x32xf32>,
    %c1 = arith.constant 1 : index
    %c0_7 = arith.constant 0 : index
    %c0_8 = arith.constant 0 : index
    %7 = vector.load %arg2[%c1, %c0_7, %c0_8] : memref<2x32x32xbf16, #tpu.memory_space<vmem>>, vector<1x32x32xbf16>
    %8 = vector.shape_cast %7 : vector<1x32x32xbf16> to vector<32x32xbf16>
    %cst_9 = arith.constant dense<0.000000e+00> : vector<8x32xf32>
    %9 = tpu.matmul %1, %8, %cst_9 {dimension_numbers = #tpu.dot_dimension_numbers<[1], [0], [0], [1], [0, 0, 1, 1], [], []>} : vector<8x32xbf16>, vector<32x32xbf16>, vector<8x32xf32> -> vector<8x32xf32>
    %c16 = arith.constant 16 : index
    %c0_10 = arith.constant 0 : index
    %10 = vector.load %arg12[%c16, %c0_10] : memref<24x32xf32, #tpu.memory_space<vmem>>, vector<8x32xf32>
    tpu.vector_store %arg12[%c16, %c0_10], %9 {strides = array<i32>} : memref<24x32xf32, #tpu.memory_space<vmem>>, vector<8x32xf32>,
    %c0_11 = arith.constant 0 : index
    %c0_12 = arith.constant 0 : index
    %11 = vector.load %arg12[%c0_11, %c0_12] : memref<24x32xf32, #tpu.memory_space<vmem>>, vector<24x32xf32>
    %c0_13 = arith.constant 0 : index
    %c0_14 = arith.constant 0 : index
    %12 = vector.load %arg3[%c0_13, %c0_14] : memref<8x24xbf16, #tpu.memory_space<vmem>>, vector<8x24xbf16>
    %13 = arith.truncf %11 : vector<24x32xf32> to vector<24x32xbf16>
    %cst_15 = arith.constant dense<0.000000e+00> : vector<8x32xf32>
    %14 = tpu.matmul %12, %13, %cst_15 {dimension_numbers = #tpu.dot_dimension_numbers<[1], [0], [0], [1], [0, 0, 1, 1], [], []>} : vector<8x24xbf16>, vector<24x32xbf16>, vector<8x32xf32> -> vector<8x32xf32>
    %c0_16 = arith.constant 0 : index
    %c0_17 = arith.constant 0 : index
    %15 = vector.load %arg4[%c0_16, %c0_17] : memref<8x32xf32, #tpu.memory_space<vmem>>, vector<8x32xf32>
    %16 = arith.addf %14, %15 : vector<8x32xf32>
    %cst_18 = arith.constant 1.000000e-01 : f32
    %17 = vector.broadcast %cst_18 : f32 to vector<8x32xf32>
    %18 = arith.mulf %17, %16 : vector<8x32xf32>
    %19 = arith.maximumf %16, %18 : vector<8x32xf32>
    %20 = arith.truncf %19 : vector<8x32xf32> to vector<8x32xbf16>
    %c0_19 = arith.constant 0 : index
    %c0_20 = arith.constant 0 : index
    %21 = vector.load %arg12[%c0_19, %c0_20] : memref<24x32xf32, #tpu.memory_space<vmem>>, vector<8x32xf32>
    tpu.vector_store %arg12[%c0_19, %c0_20], %19 {strides = array<i32>} : memref<24x32xf32, #tpu.memory_space<vmem>>, vector<8x32xf32>,
    %c0_21 = arith.constant 0 : index
    %c0_22 = arith.constant 0 : index
    %c0_23 = arith.constant 0 : index
    %22 = vector.load %arg2[%c0_21, %c0_22, %c0_23] : memref<2x32x32xbf16, #tpu.memory_space<vmem>>, vector<1x32x32xbf16>
    %23 = vector.shape_cast %22 : vector<1x32x32xbf16> to vector<32x32xbf16>
    %cst_24 = arith.constant dense<0.000000e+00> : vector<8x32xf32>
    %24 = tpu.matmul %20, %23, %cst_24 {dimension_numbers = #tpu.dot_dimension_numbers<[1], [0], [0], [1], [0, 0, 1, 1], [], []>} : vector<8x32xbf16>, vector<32x32xbf16>, vector<8x32xf32> -> vector<8x32xf32>
    %c8_25 = arith.constant 8 : index
    %c0_26 = arith.constant 0 : index
    %25 = vector.load %arg12[%c8_25, %c0_26] : memref<24x32xf32, #tpu.memory_space<vmem>>, vector<8x32xf32>
    tpu.vector_store %arg12[%c8_25, %c0_26], %24 {strides = array<i32>} : memref<24x32xf32, #tpu.memory_space<vmem>>, vector<8x32xf32>,
    %c0_27 = arith.constant 0 : index
    %c0_28 = arith.constant 0 : index
    %26 = vector.load %arg12[%c0_27, %c0_28] : memref<24x32xf32, #tpu.memory_space<vmem>>, vector<16x32xf32>
    %c0_29 = arith.constant 0 : index
    %c0_30 = arith.constant 0 : index
    %27 = vector.load %arg5[%c0_29, %c0_30] : memref<8x16xbf16, #tpu.memory_space<vmem>>, vector<8x16xbf16>
    %28 = arith.truncf %26 : vector<16x32xf32> to vector<16x32xbf16>
    %cst_31 = arith.constant dense<0.000000e+00> : vector<8x32xf32>
    %29 = tpu.matmul %27, %28, %cst_31 {dimension_numbers = #tpu.dot_dimension_numbers<[1], [0], [0], [1], [0, 0, 1, 1], [], []>} : vector<8x16xbf16>, vector<16x32xbf16>, vector<8x32xf32> -> vector<8x32xf32>
    %c0_32 = arith.constant 0 : index
    %c0_33 = arith.constant 0 : index
    %30 = vector.load %arg6[%c0_32, %c0_33] : memref<8x32xf32, #tpu.memory_space<vmem>>, vector<8x32xf32>
    %31 = arith.addf %29, %30 : vector<8x32xf32>
    %cst_34 = arith.constant 1.000000e-01 : f32
    %32 = vector.broadcast %cst_34 : f32 to vector<8x32xf32>
    %33 = arith.mulf %32, %31 : vector<8x32xf32>
    %34 = arith.maximumf %31, %33 : vector<8x32xf32>
    %c0_35 = arith.constant 0 : index
    %c0_36 = arith.constant 0 : index
    %35 = vector.load %arg7[%c0_35, %c0_36] : memref<16x8xbf16, #tpu.memory_space<vmem>>, vector<16x8xbf16>
    %36 = arith.truncf %34 : vector<8x32xf32> to vector<8x32xbf16>
    %cst_37 = arith.constant dense<0.000000e+00> : vector<16x32xf32>
    %37 = tpu.matmul %35, %36, %cst_37 {dimension_numbers = #tpu.dot_dimension_numbers<[1], [0], [0], [1], [0, 0, 1, 1], [], []>} : vector<16x8xbf16>, vector<8x32xbf16>, vector<16x32xf32> -> vector<16x32xf32>
    %c0_38 = arith.constant 0 : index
    %c0_39 = arith.constant 0 : index
    %38 = vector.load %arg8[%c0_38, %c0_39] : memref<16x32xf32, #tpu.memory_space<vmem>>, vector<16x32xf32>
    %39 = arith.addf %37, %38 : vector<16x32xf32>
    %cst_40 = arith.constant 1.000000e-01 : f32
    %40 = vector.broadcast %cst_40 : f32 to vector<16x32xf32>
    %41 = arith.mulf %40, %39 : vector<16x32xf32>
    %42 = arith.maximumf %39, %41 : vector<16x32xf32>
    %c0_41 = arith.constant 0 : index
    %c0_42 = arith.constant 0 : index
    %43 = vector.load %arg9[%c0_41, %c0_42] : memref<1x16xbf16, #tpu.memory_space<vmem>>, vector<1x16xbf16>
    %44 = arith.truncf %42 : vector<16x32xf32> to vector<16x32xbf16>
    %cst_43 = arith.constant dense<0.000000e+00> : vector<1x32xf32>
    %45 = tpu.matmul %43, %44, %cst_43 {dimension_numbers = #tpu.dot_dimension_numbers<[1], [0], [0], [1], [0, 0, 1, 1], [], []>} : vector<1x16xbf16>, vector<16x32xbf16>, vector<1x32xf32> -> vector<1x32xf32>
    %c0_44 = arith.constant 0 : index
    %c0_45 = arith.constant 0 : index
    %46 = vector.load %arg10[%c0_44, %c0_45] : memref<1x32xf32, #tpu.memory_space<vmem>>, vector<1x32xf32>
    %47 = arith.addf %45, %46 : vector<1x32xf32>
    %cst_46 = arith.constant 1.000000e-01 : f32
    %48 = vector.broadcast %cst_46 : f32 to vector<1x32xf32>
    %49 = arith.mulf %48, %47 : vector<1x32xf32>
    %50 = arith.maximumf %47, %49 : vector<1x32xf32>
    %c0_47 = arith.constant 0 : index
    %c0_48 = arith.constant 0 : index
    %51 = vector.load %arg11[%c0_47, %c0_48] : memref<1x32xf32, #tpu.memory_space<vmem>>, vector<1x32xf32>
    tpu.vector_store %arg11[%c0_47, %c0_48], %50 {strides = array<i32>} : memref<1x32xf32, #tpu.memory_space<vmem>>, vector<1x32xf32>,
    return
  }
  func.func @transform_0(%arg0: i32) -> (i32, i32) {
    %c0_i32 = arith.constant 0 : i32
    %c0_i32_0 = arith.constant 0 : i32
    return %c0_i32, %arg0 : i32, i32
  }
  func.func @transform_1(%arg0: i32) -> (i32, i32, i32) {
    %c0_i32 = arith.constant 0 : i32
    %c0_i32_0 = arith.constant 0 : i32
    %c0_i32_1 = arith.constant 0 : i32
    %c0_i32_2 = arith.constant 0 : i32
    return %c0_i32, %c0_i32_0, %c0_i32_1 : i32, i32, i32
  }
  func.func @transform_2(%arg0: i32) -> (i32, i32) {
    %c0_i32 = arith.constant 0 : i32
    %c0_i32_0 = arith.constant 0 : i32
    %c0_i32_1 = arith.constant 0 : i32
    return %c0_i32, %c0_i32_0 : i32, i32
  }
  func.func @transform_3(%arg0: i32) -> (i32, i32) {
    %c0_i32 = arith.constant 0 : i32
    %c0_i32_0 = arith.constant 0 : i32
    %c0_i32_1 = arith.constant 0 : i32
    return %c0_i32, %c0_i32_0 : i32, i32
  }
  func.func @transform_4(%arg0: i32) -> (i32, i32) {
    %c0_i32 = arith.constant 0 : i32
    %c0_i32_0 = arith.constant 0 : i32
    %c0_i32_1 = arith.constant 0 : i32
    return %c0_i32, %c0_i32_0 : i32, i32
  }
  func.func @transform_5(%arg0: i32) -> (i32, i32) {
    %c0_i32 = arith.constant 0 : i32
    %c0_i32_0 = arith.constant 0 : i32
    %c0_i32_1 = arith.constant 0 : i32
    return %c0_i32, %c0_i32_0 : i32, i32
  }
  func.func @transform_6(%arg0: i32) -> (i32, i32) {
    %c0_i32 = arith.constant 0 : i32
    %c0_i32_0 = arith.constant 0 : i32
    %c0_i32_1 = arith.constant 0 : i32
    return %c0_i32, %c0_i32_0 : i32, i32
  }
  func.func @transform_7(%arg0: i32) -> (i32, i32) {
    %c0_i32 = arith.constant 0 : i32
    %c0_i32_0 = arith.constant 0 : i32
    %c0_i32_1 = arith.constant 0 : i32
    return %c0_i32, %c0_i32_0 : i32, i32
  }
  func.func @transform_8(%arg0: i32) -> (i32, i32) {
    %c0_i32 = arith.constant 0 : i32
    %c0_i32_0 = arith.constant 0 : i32
    %c0_i32_1 = arith.constant 0 : i32
    return %c0_i32, %c0_i32_0 : i32, i32
  }
  func.func @transform_9(%arg0: i32) -> (i32, i32) {
    %c0_i32 = arith.constant 0 : i32
    %c0_i32_0 = arith.constant 0 : i32
    %c0_i32_1 = arith.constant 0 : i32
    return %c0_i32, %c0_i32_0 : i32, i32
  }
  func.func @transform_10(%arg0: i32) -> (i32, i32) {
    %c0_i32 = arith.constant 0 : i32
    %c0_i32_0 = arith.constant 0 : i32
    return %c0_i32, %arg0 : i32, i32
  }
}

</mosaic_0001>

<llo_original>
// kernel: convgnn_forward.1
$region0: #{convgnn_forward.1}
  #allocation0 [shape = 'u32[]', space=smem, size = 0x4, offset = 0x4, fixed_abs, tag = 'smem constant byte address 0x4 - core index']
  #allocation1 [shape = 'u32[144,128]{1,0:T(1,128)}', space=vmem, size = 0x12000, scoped, tag = 'internal scratch']
  #allocation2 [shape = 'f32[24,32]{1,0:T(8,128)}', space=vmem, size = 0x3000, scoped, tag = 'scratch operand']
  %s0 = inlined_call_operand.vmem [shape: f32[8,32], index: 0, kind: input, shape index: {}]
  %s1 = inlined_call_operand.vmem [shape: bf16[2,32,32], index: 1, kind: input, shape index: {}]
  %s2 = inlined_call_operand.vmem [shape: bf16[8,24], index: 2, kind: input, shape index: {}]
  %s3 = inlined_call_operand.vmem [shape: f32[8,32], index: 3, kind: input, shape index: {}]
  %s4 = inlined_call_operand.vmem [shape: bf16[8,16], index: 4, kind: input, shape index: {}]
  %s5 = inlined_call_operand.vmem [shape: f32[8,32], index: 5, kind: input, shape index: {}]
  %s6 = inlined_call_operand.vmem [shape: bf16[16,8], index: 6, kind: input, shape index: {}]
  %s7 = inlined_call_operand.vmem [shape: f32[16,32], index: 7, kind: input, shape index: {}]
  %s8 = inlined_call_operand.vmem [shape: bf16[1,16], index: 8, kind: input, shape index: {}]
  %s9 = inlined_call_operand.vmem [shape: f32[1,32], index: 9, kind: input, shape index: {}]
  %s10 = inlined_call_operand.vmem [shape: f32[1,32], index: 10, kind: output, shape index: {}]
  %s11 = sld [smem:[#allocation0]]
  $region50: #{convgnn_forward.1} parent=0
    _
  %s13 = ssub.s32 1, %s11
  %s14 = scalar_select 0, %s13, %s11
  // Predicated region
  $region2: #{convgnn_forward.1} parent=0 // pred_check
    _
  $region3: #{convgnn_forward.1} parent=0 // pred_check_branch
    %16 = sbr.rel (0) target = $region5
  $region4: #{convgnn_forward.1} parent=0 // pred_region
    _
  $region5: #{convgnn_forward.1} parent=0 // pred_fallthru
    _
  // Predicated region
  $region6: #{convgnn_forward.1} parent=0 // pred_check
    _
  $region7: #{convgnn_forward.1} parent=0 // pred_check_branch
    %18 = sbr.rel (0) target = $region9
  $region8: #{convgnn_forward.1} parent=0 // pred_region
    _
  $region9: #{convgnn_forward.1} parent=0 // pred_fallthru
    _
  // Predicated region
  $region10: #{convgnn_forward.1} parent=0 // pred_check
    _
  $region11: #{convgnn_forward.1} parent=0 // pred_check_branch
    %20 = sbr.rel (0) target = $region13
  $region12: #{convgnn_forward.1} parent=0 // pred_region
    _
  $region13: #{convgnn_forward.1} parent=0 // pred_fallthru
    _
  // Predicated region
  $region14: #{convgnn_forward.1} parent=0 // pred_check
    _
  $region15: #{convgnn_forward.1} parent=0 // pred_check_branch
    %22 = sbr.rel (0) target = $region17
  $region16: #{convgnn_forward.1} parent=0 // pred_region
    _
  $region17: #{convgnn_forward.1} parent=0 // pred_fallthru
    _
  // Predicated region
  $region18: #{convgnn_forward.1} parent=0 // pred_check
    _
  $region19: #{convgnn_forward.1} parent=0 // pred_check_branch
    %24 = sbr.rel (0) target = $region21
  $region20: #{convgnn_forward.1} parent=0 // pred_region
    _
  $region21: #{convgnn_forward.1} parent=0 // pred_fallthru
    _
  // Predicated region
  $region22: #{convgnn_forward.1} parent=0 // pred_check
    _
  $region23: #{convgnn_forward.1} parent=0 // pred_check_branch
    %26 = sbr.rel (0) target = $region25
  $region24: #{convgnn_forward.1} parent=0 // pred_region
    _
  $region25: #{convgnn_forward.1} parent=0 // pred_fallthru
    _
  // Predicated region
  $region26: #{convgnn_forward.1} parent=0 // pred_check
    _
  $region27: #{convgnn_forward.1} parent=0 // pred_check_branch
    %28 = sbr.rel (0) target = $region29
  $region28: #{convgnn_forward.1} parent=0 // pred_region
    _
  $region29: #{convgnn_forward.1} parent=0 // pred_fallthru
    _
  // Predicated region
  $region30: #{convgnn_forward.1} parent=0 // pred_check
    _
  $region31: #{convgnn_forward.1} parent=0 // pred_check_branch
    %30 = sbr.rel (0) target = $region33
  $region32: #{convgnn_forward.1} parent=0 // pred_region
    _
  $region33: #{convgnn_forward.1} parent=0 // pred_fallthru
    _
  // Predicated region
  $region34: #{convgnn_forward.1} parent=0 // pred_check
    _
  $region35: #{convgnn_forward.1} parent=0 // pred_check_branch
    %32 = sbr.rel (0) target = $region37
  $region36: #{convgnn_forward.1} parent=0 // pred_region
    _
  $region37: #{convgnn_forward.1} parent=0 // pred_fallthru
    _
  // Predicated region
  $region38: #{convgnn_forward.1} parent=0 // pred_check
    _
  $region39: #{convgnn_forward.1} parent=0 // pred_check_branch
    %34 = sbr.rel (0) target = $region41
  $region40: #{convgnn_forward.1} parent=0 // pred_region
    _
  $region41: #{convgnn_forward.1} parent=0 // pred_fallthru
    _
  %v36 = vld [vmem:[%s0] sm:$0xff]
  %v37 = vpack.c.bf16 %v36, %v36
  %vm38 = vcmask 261120
  %39 = vst.msk [vmem:[#allocation2] sm:$0xff] %vm38, %v36
  %v40 = vld [vmem:[%s1] sm:$0xf]
  %v41 = vld [vmem:[%s1 + $0x4] sm:$0xf]
  %v42 = vld [vmem:[%s1 + $0x8] sm:$0xf]
  %v43 = vld [vmem:[%s1 + $0xc] sm:$0xf]
  %v48 = vunpack.c.l.b16 %v40
  %v49 = vunpack.c.l.b16 %v41
  %v50 = vunpack.c.l.b16 %v42
  %v51 = vunpack.c.l.b16 %v43
  %v52 = vpack.c.b16 %v49, %v48
  %v53 = vpack.c.b16 %v51, %v50
  %v57 = vsel %vm38, %v37, 0
  %59 = vmatprep.subr.bf16.mxu0 0
  %60 = vmatpush1.bf16.msra.mxu0 0
  %61 = vmatprep.subr.bf16.mxu0 0
  %62 = vmatpush1.bf16.msra.mxu0 0
  %63 = vmatprep.subr.bf16.mxu0 0
  %64 = vmatpush1.bf16.msra.mxu0 0
  %65 = vmatprep.subr.bf16.mxu0 0
  %66 = vmatpush1.bf16.msra.mxu0 0
  %67 = vmatprep.subr.bf16.mxu0 0
  %68 = vmatpush1.bf16.msra.mxu0 0
  %69 = vmatprep.subr.bf16.mxu0 0
  %70 = vmatpush1.bf16.msra.mxu0 0
  %71 = vmatprep.subr.bf16.mxu0 0
  %72 = vmatpush1.bf16.msra.mxu0 %v53
  %73 = vmatprep.subr.bf16.mxu0 0
  %74 = vmatpush1.bf16.msra.mxu0 %v52
  %75 = vmatprep.subr.bf16.mxu0 0
  %76 = vmatpush2.bf16.msra.mxu0 0
  %77 = vmatprep.subr.bf16.mxu0 0
  %78 = vmatpush2.bf16.msra.mxu0 0
  %79 = vmatprep.subr.bf16.mxu0 0
  %80 = vmatpush2.bf16.msra.mxu0 0
  %81 = vmatprep.subr.bf16.mxu0 0
  %82 = vmatpush2.bf16.msra.mxu0 0
  %83 = vmatprep.subr.bf16.mxu0 0
  %84 = vmatpush2.bf16.msra.mxu0 0
  %85 = vmatprep.subr.bf16.mxu0 0
  %86 = vmatpush2.bf16.msra.mxu0 0
  %87 = vmatprep.subr.bf16.mxu0 0
  %88 = vmatpush2.bf16.msra.mxu0 0
  %89 = vmatprep.subr.bf16.mxu0 0
  %90 = vmatpush2.bf16.msra.mxu0 0
  %91 = vmatprep.mubr.bf16.mxu0 0
  %92 = vmatmul.mubr.bf16.gmra.mxu0 %v57
  %v93 = vpop.f32.mrf.mxu0
  %v94 = vadd.f32 0.0, %v93
  %v95 = vpop.f32.mrf.mxu0
  %v96 = vpop.f32.mrf.mxu0
  %v97 = vpop.f32.mrf.mxu0
  %98 = vdwg.mxu0
  %99 = vst.msk [vmem:[#allocation2 + $0x8] sm:$0xff] %vm38, %v94
  %s100 = scalar_lea.vmem %s1, 16
  %v101 = vld [vmem:[%s100] sm:$0xf]
  %v102 = vld [vmem:[%s100 + $0x4] sm:$0xf]
  %v103 = vld [vmem:[%s100 + $0x8] sm:$0xf]
  %v104 = vld [vmem:[%s100 + $0xc] sm:$0xf]
  %v109 = vunpack.c.l.b16 %v101
  %v110 = vunpack.c.l.b16 %v102
  %v111 = vunpack.c.l.b16 %v103
  %v112 = vunpack.c.l.b16 %v104
  %v113 = vpack.c.b16 %v110, %v109
  %v114 = vpack.c.b16 %v112, %v111
  %117 = vmatprep.subr.bf16.mxu0 0
  %118 = vmatpush1.bf16.msra.mxu0 0
  %119 = vmatprep.subr.bf16.mxu0 0
  %120 = vmatpush1.bf16.msra.mxu0 0
  %121 = vmatprep.subr.bf16.mxu0 0
  %122 = vmatpush1.bf16.msra.mxu0 0
  %123 = vmatprep.subr.bf16.mxu0 0
  %124 = vmatpush1.bf16.msra.mxu0 0
  %125 = vmatprep.subr.bf16.mxu0 0
  %126 = vmatpush1.bf16.msra.mxu0 0
  %127 = vmatprep.subr.bf16.mxu0 0
  %128 = vmatpush1.bf16.msra.mxu0 0
  %129 = vmatprep.subr.bf16.mxu0 0
  %130 = vmatpush1.bf16.msra.mxu0 %v114
  %131 = vmatprep.subr.bf16.mxu0 0
  %132 = vmatpush1.bf16.msra.mxu0 %v113
  %133 = vmatprep.subr.bf16.mxu0 0
  %134 = vmatpush2.bf16.msra.mxu0 0
  %135 = vmatprep.subr.bf16.mxu0 0
  %136 = vmatpush2.bf16.msra.mxu0 0
  %137 = vmatprep.subr.bf16.mxu0 0
  %138 = vmatpush2.bf16.msra.mxu0 0
  %139 = vmatprep.subr.bf16.mxu0 0
  %140 = vmatpush2.bf16.msra.mxu0 0
  %141 = vmatprep.subr.bf16.mxu0 0
  %142 = vmatpush2.bf16.msra.mxu0 0
  %143 = vmatprep.subr.bf16.mxu0 0
  %144 = vmatpush2.bf16.msra.mxu0 0
  %145 = vmatprep.subr.bf16.mxu0 0
  %146 = vmatpush2.bf16.msra.mxu0 0
  %147 = vmatprep.subr.bf16.mxu0 0
  %148 = vmatpush2.bf16.msra.mxu0 0
  %149 = vmatprep.mubr.bf16.mxu0 0
  %150 = vmatmul.mubr.bf16.gmra.mxu0 %v57
  %v151 = vpop.f32.mrf.mxu0
  %v152 = vadd.f32 0.0, %v151
  %v153 = vpop.f32.mrf.mxu0
  %v154 = vpop.f32.mrf.mxu0
  %v155 = vpop.f32.mrf.mxu0
  %156 = vdwg.mxu0
  %157 = vst.msk [vmem:[#allocation2 + $0x10] sm:$0xff] %vm38, %v152
  %v158 = vld [vmem:[#allocation2] sm:$0xff]
  %v159 = vld [vmem:[#allocation2 + $0x8] sm:$0xff]
  %v160 = vld [vmem:[#allocation2 + $0x10] sm:$0xff]
  %v161 = vld [vmem:[%s2] sm:$0xf]
  %v162 = vpack.c.bf16 %v159, %v158
  %v163 = vpack.c.bf16 %v160, %v160
  %v164 = vld [vmem:[%s3] sm:$0xff]
  %vm165 = vcmask 195584
  %v167 = vsel %vm165, %v161, 0
  %vm169 = vcmask 1043456
  %v171 = vsel %vm169, %v163, 0
  %173 = vmatprep.subr.bf16.mxu0 0
  %174 = vmatpush1.bf16.msra.mxu0 0
  %175 = vmatprep.subr.bf16.mxu0 0
  %176 = vmatpush1.bf16.msra.mxu0 0
  %177 = vmatprep.subr.bf16.mxu0 0
  %178 = vmatpush1.bf16.msra.mxu0 0
  %179 = vmatprep.subr.bf16.mxu0 0
  %180 = vmatpush1.bf16.msra.mxu0 0
  %181 = vmatprep.subr.bf16.mxu0 0
  %182 = vmatpush1.bf16.msra.mxu0 0
  %183 = vmatprep.subr.bf16.mxu0 0
  %184 = vmatpush1.bf16.msra.mxu0 0
  %185 = vmatprep.subr.bf16.mxu0 0
  %186 = vmatpush1.bf16.msra.mxu0 %v171
  %187 = vmatprep.subr.bf16.mxu0 0
  %188 = vmatpush1.bf16.msra.mxu0 %v162
  %189 = vmatprep.subr.bf16.mxu0 0
  %190 = vmatpush2.bf16.msra.mxu0 0
  %191 = vmatprep.subr.bf16.mxu0 0
  %192 = vmatpush2.bf16.msra.mxu0 0
  %193 = vmatprep.subr.bf16.mxu0 0
  %194 = vmatpush2.bf16.msra.mxu0 0
  %195 = vmatprep.subr.bf16.mxu0 0
  %196 = vmatpush2.bf16.msra.mxu0 0
  %197 = vmatprep.subr.bf16.mxu0 0
  %198 = vmatpush2.bf16.msra.mxu0 0
  %199 = vmatprep.subr.bf16.mxu0 0
  %200 = vmatpush2.bf16.msra.mxu0 0
  %201 = vmatprep.subr.bf16.mxu0 0
  %202 = vmatpush2.bf16.msra.mxu0 0
  %203 = vmatprep.subr.bf16.mxu0 0
  %204 = vmatpush2.bf16.msra.mxu0 0
  %205 = vmatprep.mubr.bf16.mxu0 0
  %206 = vmatmul.mubr.bf16.gmra.mxu0 %v167
  %v207 = vpop.f32.mrf.mxu0
  %v208 = vadd.f32 %v164, %v207
  %v209 = vpop.f32.mrf.mxu0
  %v210 = vpop.f32.mrf.mxu0
  %v211 = vpop.f32.mrf.mxu0
  %212 = vdwg.mxu0
  %v213 = vmul.f32 %v208, 0.1
  %v214 = vmax.f32 %v208, %v213
  %v215 = vpack.c.bf16 %v214, %v214
  %216 = vst.msk [vmem:[#allocation2] sm:$0xff] %vm38, %v214
  %v217 = vld [vmem:[%s1] sm:$0xf]
  %v218 = vld [vmem:[%s1 + $0x4] sm:$0xf]
  %v219 = vld [vmem:[%s1 + $0x8] sm:$0xf]
  %v220 = vld [vmem:[%s1 + $0xc] sm:$0xf]
  %v225 = vunpack.c.l.b16 %v217
  %v226 = vunpack.c.l.b16 %v218
  %v227 = vunpack.c.l.b16 %v219
  %v228 = vunpack.c.l.b16 %v220
  %v229 = vpack.c.b16 %v226, %v225
  %v230 = vpack.c.b16 %v228, %v227
  %v234 = vsel %vm38, %v215, 0
  %236 = vmatprep.subr.bf16.mxu0 0
  %237 = vmatpush1.bf16.msra.mxu0 0
  %238 = vmatprep.subr.bf16.mxu0 0
  %239 = vmatpush1.bf16.msra.mxu0 0
  %240 = vmatprep.subr.bf16.mxu0 0
  %241 = vmatpush1.bf16.msra.mxu0 0
  %242 = vmatprep.subr.bf16.mxu0 0
  %243 = vmatpush1.bf16.msra.mxu0 0
  %244 = vmatprep.subr.bf16.mxu0 0
  %245 = vmatpush1.bf16.msra.mxu0 0
  %246 = vmatprep.subr.bf16.mxu0 0
  %247 = vmatpush1.bf16.msra.mxu0 0
  %248 = vmatprep.subr.bf16.mxu0 0
  %249 = vmatpush1.bf16.msra.mxu0 %v230
  %250 = vmatprep.subr.bf16.mxu0 0
  %251 = vmatpush1.bf16.msra.mxu0 %v229
  %252 = vmatprep.subr.bf16.mxu0 0
  %253 = vmatpush2.bf16.msra.mxu0 0
  %254 = vmatprep.subr.bf16.mxu0 0
  %255 = vmatpush2.bf16.msra.mxu0 0
  %256 = vmatprep.subr.bf16.mxu0 0
  %257 = vmatpush2.bf16.msra.mxu0 0
  %258 = vmatprep.subr.bf16.mxu0 0
  %259 = vmatpush2.bf16.msra.mxu0 0
  %260 = vmatprep.subr.bf16.mxu0 0
  %261 = vmatpush2.bf16.msra.mxu0 0
  %262 = vmatprep.subr.bf16.mxu0 0
  %263 = vmatpush2.bf16.msra.mxu0 0
  %264 = vmatprep.subr.bf16.mxu0 0
  %265 = vmatpush2.bf16.msra.mxu0 0
  %266 = vmatprep.subr.bf16.mxu0 0
  %267 = vmatpush2.bf16.msra.mxu0 0
  %268 = vmatprep.mubr.bf16.mxu0 0
  %269 = vmatmul.mubr.bf16.gmra.mxu0 %v234
  %v270 = vpop.f32.mrf.mxu0
  %v271 = vadd.f32 0.0, %v270
  %v272 = vpop.f32.mrf.mxu0
  %v273 = vpop.f32.mrf.mxu0
  %v274 = vpop.f32.mrf.mxu0
  %275 = vdwg.mxu0
  %276 = vst.msk [vmem:[#allocation2 + $0x8] sm:$0xff] %vm38, %v271
  %v277 = vld [vmem:[#allocation2] sm:$0xff]
  %v278 = vld [vmem:[#allocation2 + $0x8] sm:$0xff]
  %v279 = vld [vmem:[%s4] sm:$0xf]
  %v280 = vpack.c.bf16 %v278, %v277
  %v281 = vld [vmem:[%s5] sm:$0xff]
  %vm282 = vcmask 130048
  %v284 = vsel %vm282, %v279, 0
  %286 = vmatprep.subr.bf16.mxu0 0
  %287 = vmatpush1.bf16.msra.mxu0 0
  %288 = vmatprep.subr.bf16.mxu0 0
  %289 = vmatpush1.bf16.msra.mxu0 0
  %290 = vmatprep.subr.bf16.mxu0 0
  %291 = vmatpush1.bf16.msra.mxu0 0
  %292 = vmatprep.subr.bf16.mxu0 0
  %293 = vmatpush1.bf16.msra.mxu0 0
  %294 = vmatprep.subr.bf16.mxu0 0
  %295 = vmatpush1.bf16.msra.mxu0 0
  %296 = vmatprep.subr.bf16.mxu0 0
  %297 = vmatpush1.bf16.msra.mxu0 0
  %298 = vmatprep.subr.bf16.mxu0 0
  %299 = vmatpush1.bf16.msra.mxu0 0
  %300 = vmatprep.subr.bf16.mxu0 0
  %301 = vmatpush1.bf16.msra.mxu0 %v280
  %302 = vmatprep.subr.bf16.mxu0 0
  %303 = vmatpush2.bf16.msra.mxu0 0
  %304 = vmatprep.subr.bf16.mxu0 0
  %305 = vmatpush2.bf16.msra.mxu0 0
  %306 = vmatprep.subr.bf16.mxu0 0
  %307 = vmatpush2.bf16.msra.mxu0 0
  %308 = vmatprep.subr.bf16.mxu0 0
  %309 = vmatpush2.bf16.msra.mxu0 0
  %310 = vmatprep.subr.bf16.mxu0 0
  %311 = vmatpush2.bf16.msra.mxu0 0
  %312 = vmatprep.subr.bf16.mxu0 0
  %313 = vmatpush2.bf16.msra.mxu0 0
  %314 = vmatprep.subr.bf16.mxu0 0
  %315 = vmatpush2.bf16.msra.mxu0 0
  %316 = vmatprep.subr.bf16.mxu0 0
  %317 = vmatpush2.bf16.msra.mxu0 0
  %318 = vmatprep.mubr.bf16.mxu0 0
  %319 = vmatmul.mubr.bf16.gmra.mxu0 %v284
  %v320 = vpop.f32.mrf.mxu0
  %v321 = vadd.f32 %v281, %v320
  %v322 = vpop.f32.mrf.mxu0
  %v323 = vpop.f32.mrf.mxu0
  %v324 = vpop.f32.mrf.mxu0
  %325 = vdwg.mxu0
  %v326 = vmul.f32 %v321, 0.1
  %v327 = vmax.f32 %v321, %v326
  %v328 = vld [vmem:[%s6] sm:$0xf]
  %v329 = vld [vmem:[%s6 + $0x4] sm:$0xf]
  %v330 = vpack.c.bf16 %v327, %v327
  %v331 = vld [vmem:[%s7] sm:$0xff]
  %v332 = vld [vmem:[%s7 + $0x8] sm:$0xff]
  %v335 = vunpack.c.l.b16 %v328
  %v336 = vunpack.c.l.b16 %v329
  %v337 = vpack.c.b16 %v336, %v335
  %vm338 = vcmask 64512
  %v340 = vsel %vm338, %v337, 0
  %v343 = vsel %vm169, %v330, 0
  %345 = vmatprep.subr.bf16.mxu0 0
  %346 = vmatpush1.bf16.msra.mxu0 0
  %347 = vmatprep.subr.bf16.mxu0 0
  %348 = vmatpush1.bf16.msra.mxu0 0
  %349 = vmatprep.subr.bf16.mxu0 0
  %350 = vmatpush1.bf16.msra.mxu0 0
  %351 = vmatprep.subr.bf16.mxu0 0
  %352 = vmatpush1.bf16.msra.mxu0 0
  %353 = vmatprep.subr.bf16.mxu0 0
  %354 = vmatpush1.bf16.msra.mxu0 0
  %355 = vmatprep.subr.bf16.mxu0 0
  %356 = vmatpush1.bf16.msra.mxu0 0
  %357 = vmatprep.subr.bf16.mxu0 0
  %358 = vmatpush1.bf16.msra.mxu0 0
  %359 = vmatprep.subr.bf16.mxu0 0
  %360 = vmatpush1.bf16.msra.mxu0 %v343
  %361 = vmatprep.subr.bf16.mxu0 0
  %362 = vmatpush2.bf16.msra.mxu0 0
  %363 = vmatprep.subr.bf16.mxu0 0
  %364 = vmatpush2.bf16.msra.mxu0 0
  %365 = vmatprep.subr.bf16.mxu0 0
  %366 = vmatpush2.bf16.msra.mxu0 0
  %367 = vmatprep.subr.bf16.mxu0 0
  %368 = vmatpush2.bf16.msra.mxu0 0
  %369 = vmatprep.subr.bf16.mxu0 0
  %370 = vmatpush2.bf16.msra.mxu0 0
  %371 = vmatprep.subr.bf16.mxu0 0
  %372 = vmatpush2.bf16.msra.mxu0 0
  %373 = vmatprep.subr.bf16.mxu0 0
  %374 = vmatpush2.bf16.msra.mxu0 0
  %375 = vmatprep.subr.bf16.mxu0 0
  %376 = vmatpush2.bf16.msra.mxu0 0
  %377 = vmatprep.mubr.bf16.mxu0 0
  %378 = vmatmul.mubr.bf16.gmra.mxu0 %v340
  %v379 = vpop.f32.mrf.mxu0
  %v380 = vadd.f32 %v331, %v379
  %v381 = vpop.f32.mrf.mxu0
  %v382 = vpop.f32.mrf.mxu0
  %v383 = vadd.f32 %v332, %v382
  %v384 = vpop.f32.mrf.mxu0
  %385 = vdwg.mxu0
  %v386 = vmul.f32 %v380, 0.1
  %v387 = vmul.f32 %v383, 0.1
  %v388 = vmax.f32 %v380, %v386
  %v389 = vmax.f32 %v383, %v387
  %v390 = vld [vmem:[%s8] sm:$0x1]
  %v391 = vpack.c.bf16 %v389, %v388
  %v392 = vld [vmem:[%s9] sm:$0x1]
  %v394 = vsel %vm282, %v390, 0
  %396 = vmatprep.subr.bf16.mxu0 0
  %397 = vmatpush1.bf16.msra.mxu0 0
  %398 = vmatprep.subr.bf16.mxu0 0
  %399 = vmatpush1.bf16.msra.mxu0 0
  %400 = vmatprep.subr.bf16.mxu0 0
  %401 = vmatpush1.bf16.msra.mxu0 0
  %402 = vmatprep.subr.bf16.mxu0 0
  %403 = vmatpush1.bf16.msra.mxu0 0
  %404 = vmatprep.subr.bf16.mxu0 0
  %405 = vmatpush1.bf16.msra.mxu0 0
  %406 = vmatprep.subr.bf16.mxu0 0
  %407 = vmatpush1.bf16.msra.mxu0 0
  %408 = vmatprep.subr.bf16.mxu0 0
  %409 = vmatpush1.bf16.msra.mxu0 0
  %410 = vmatprep.subr.bf16.mxu0 0
  %411 = vmatpush1.bf16.msra.mxu0 %v391
  %412 = vmatprep.subr.bf16.mxu0 0
  %413 = vmatpush2.bf16.msra.mxu0 0
  %414 = vmatprep.subr.bf16.mxu0 0
  %415 = vmatpush2.bf16.msra.mxu0 0
  %416 = vmatprep.subr.bf16.mxu0 0
  %417 = vmatpush2.bf16.msra.mxu0 0
  %418 = vmatprep.subr.bf16.mxu0 0
  %419 = vmatpush2.bf16.msra.mxu0 0
  %420 = vmatprep.subr.bf16.mxu0 0
  %421 = vmatpush2.bf16.msra.mxu0 0
  %422 = vmatprep.subr.bf16.mxu0 0
  %423 = vmatpush2.bf16.msra.mxu0 0
  %424 = vmatprep.subr.bf16.mxu0 0
  %425 = vmatpush2.bf16.msra.mxu0 0
  %426 = vmatprep.subr.bf16.mxu0 0
  %427 = vmatpush2.bf16.msra.mxu0 0
  %428 = vmatprep.mubr.bf16.mxu0 0
  %429 = vmatmul.mubr.bf16.gmra.mxu0 %v394
  %v430 = vpop.f32.mrf.mxu0
  %v431 = vadd.f32 %v392, %v430
  %v432 = vpop.f32.mrf.mxu0
  %v433 = vpop.f32.mrf.mxu0
  %v434 = vpop.f32.mrf.mxu0
  %435 = vdwg.mxu0
  %v436 = vmul.f32 %v431, 0.1
  %v437 = vmax.f32 %v431, %v436
  %vm438 = vcmask 253952
  %439 = vst.msk [vmem:[%s10] sm:$0x1] %vm438, %v437
  // Predicated region
  $region42: #{convgnn_forward.1} parent=0 // pred_check
    _
  $region43: #{convgnn_forward.1} parent=0 // pred_check_branch
    %441 = sbr.rel (0) target = $region45
  $region44: #{convgnn_forward.1} parent=0 // pred_region
    _
  $region45: #{convgnn_forward.1} parent=0 // pred_fallthru
    _
  // Predicated region
  $region46: #{convgnn_forward.1} parent=0 // pred_check
    _
  $region47: #{convgnn_forward.1} parent=0 // pred_check_branch
    %443 = sbr.rel (0) target = $region49
  $region48: #{convgnn_forward.1} parent=0 // pred_region
    _
  $region49: #{convgnn_forward.1} parent=0 // pred_fallthru
    _

</llo_original>
